<compile_context>
chip_gen: v5e
topology: v5e:2x2
jax: 0.10.0
libtpu: 0.0.40
codegen_flags: <defaults>
</compile_context>

<pallas_src>
import jax
import jax.numpy as jnp
from jax.experimental import pallas as pl
from jax.experimental.pallas import tpu as pltpu


def _round_up(x: int, m: int) -> int:
    return ((x + m - 1) // m) * m


def _categorical_kernel(
    x_ref,              # (D_in, TB) bf16   batch tile, batch on lanes
    u_ref,              # (1, TB)    f32    one uniform in [0,1) per row
    w1_ref, b1_ref,     # (H1, D_in) bf16, (H1, 1) f32
    w2_ref, b2_ref,     # (H2, H1)   bf16, (H2, 1) f32
    wl_ref, bl_ref,     # (K,  H2)   bf16, (K,  1) f32
    action_ref,         # out (1, TB) int32
    lp_ref,             # out (1, TB) f32   per-row log-prob of sampled action
):
    x = x_ref[...]

    # ---- MLP hidden stack (hidden_activation = ReLU); bf16 MXU, f32 accum ----
    h = jnp.dot(w1_ref[...], x, preferred_element_type=jnp.float32) + b1_ref[...]
    h = jnp.maximum(h, 0.0)
    h = jnp.dot(w2_ref[...], h.astype(jnp.bfloat16),
                preferred_element_type=jnp.float32) + b2_ref[...]
    h = jnp.maximum(h, 0.0)

    # ---- last_layer -> logits (K, TB) ----
    logits = jnp.dot(wl_ref[...], h.astype(jnp.bfloat16),
                     preferred_element_type=jnp.float32) + bl_ref[...]
    k, tb = logits.shape

    # ---- softmax pieces; reductions over the (sublane) category axis ----
    m = jnp.max(logits, axis=0, keepdims=True)        # (1, TB)
    z = logits - m
    e = jnp.exp(z)                                    # (K, TB)
    s = jnp.sum(e, axis=0, keepdims=True)             # (1, TB), >= 1

    # ---- Categorical.sample() via inverse CDF (one uniform per row) ----
    thresh = u_ref[...] * s                           # u in [0,1) scaled by mass
    run = jnp.zeros_like(thresh)
    count = jnp.zeros(thresh.shape, jnp.int32)
    for c in range(k):                                # K is small & static: unrolled
        run = run + e[c:c + 1, :]                     # inclusive prefix mass
        count = count + (run <= thresh).astype(jnp.int32)
    action = jnp.minimum(count, k - 1)                # fp-safety clamp, (1, TB)

    # ---- dist.log_prob(action): gather z at sampled category, subtract lse ----
    cat = jax.lax.broadcasted_iota(jnp.int32, (k, tb), 0)
    onehot = (cat == action).astype(jnp.float32)      # row broadcast over sublanes
    z_sel = jnp.sum(z * onehot, axis=0, keepdims=True)
    lp = z_sel - jnp.log(s)

    action_ref[...] = action                          # lane-dense (1, TB) stores
    lp_ref[...] = lp


def categorical_dist_params_forward(
    x, params, key, *, compatible_with_tanh_normal=False, block_b=1024
):
    """Returns (action, log_prob[, nan, nan, nan]) matching the PyTorch module."""
    w1, b1, w2, b2, wl, bl = params                   # weights (out, in) f32
    B, d_in = x.shape
    h1 = w1.shape[0]
    h2 = w2.shape[0]
    k = wl.shape[0]

    # --- batch tile: 128-aligned lanes; >= 2 tiles when B is big enough (v7x) ---
    tb = min(block_b, _round_up(max(B, 1), 128))
    if B > 128:
        tb = min(tb, _round_up(pl.cdiv(B, 2), 128))
    tb = max(tb, 128)
    num_tiles = pl.cdiv(B, tb)
    pb = num_tiles * tb

    # --- operands: batch-on-lanes, bf16 matmul inputs, f32 biases ---
    xt = x.astype(jnp.bfloat16).T                     # (d_in, B)
    if pb != B:
        xt = jnp.pad(xt, ((0, 0), (0, pb - B)))
    # one uniform per real row; padded rows get a constant so the random stream
    # does not depend on the tile size
    u = jax.random.uniform(key, (1, B), jnp.float32)
    if pb != B:
        u = jnp.pad(u, ((0, 0), (0, pb - B)), constant_values=0.5)

    w1b = w1.astype(jnp.bfloat16)
    w2b = w2.astype(jnp.bfloat16)
    wlb = wl.astype(jnp.bfloat16)
    b1c = b1.reshape(h1, 1).astype(jnp.float32)
    b2c = b2.reshape(h2, 1).astype(jnp.float32)
    blc = bl.reshape(k, 1).astype(jnp.float32)

    compiler_params = None
    if jax.default_backend() == "tpu":
        # resident weights (x2 buffers) + streamed x/u/outputs (x2) + f32 activations
        vmem_bytes = (
            2 * 2 * (h1 * d_in + h2 * h1 + k * h2)    # bf16 weights, double-buffered
            + 2 * 4 * (h1 + h2 + k)                   # f32 biases
            + 2 * (2 * d_in * tb + 4 * tb)            # x (bf16) + u (f32) tiles
            + 2 * 2 * 4 * tb                          # action + lp output tiles
            + 4 * (h1 + h2 + 4 * k + 8) * tb          # f32 intermediates
        )
        compiler_params = pltpu.CompilerParams(
            dimension_semantics=("parallel",),        # batch tiles are independent
            vmem_limit_bytes=min(max(2 * vmem_bytes, 4 << 20), 32 << 20),
        )

    action_p, lp_p = pl.pallas_call(
        _categorical_kernel,
        grid=(num_tiles,),
        in_specs=[
            pl.BlockSpec((d_in, tb), lambda i: (0, i)),   # x: streamed over batch
            pl.BlockSpec((1, tb), lambda i: (0, i)),      # uniforms: lane-dense
            pl.BlockSpec((h1, d_in), lambda i: (0, 0)),   # weights/biases: resident
            pl.BlockSpec((h1, 1), lambda i: (0, 0)),
            pl.BlockSpec((h2, h1), lambda i: (0, 0)),
            pl.BlockSpec((h2, 1), lambda i: (0, 0)),
            pl.BlockSpec((k, h2), lambda i: (0, 0)),
            pl.BlockSpec((k, 1), lambda i: (0, 0)),
        ],
        out_specs=(
            pl.BlockSpec((1, tb), lambda i: (0, i)),
            pl.BlockSpec((1, tb), lambda i: (0, i)),
        ),
        out_shape=(
            jax.ShapeDtypeStruct((1, pb), jnp.int32),
            jax.ShapeDtypeStruct((1, pb), jnp.float32),
        ),
        compiler_params=compiler_params,
    )(xt, u, w1b, b1c, w2b, b2c, wlb, blc)

    action = action_p[0, :B]                          # Categorical.sample() -> (B,)
    # PyTorch quirk: dist.log_prob(action) is (B,); .sum(dim=-1, keepdim=True) -> (1,)
    log_prob = jnp.sum(lp_p[0, :B], keepdims=True)

    if compatible_with_tanh_normal:
        nan = jnp.float32(jnp.nan)
        return action, log_prob, nan, nan, nan
    return action, log_prob


def _xavier_uniform(key, fan_out, fan_in):
    limit = (6.0 / (fan_in + fan_out)) ** 0.5
    return jax.random.uniform(key, (fan_out, fan_in), jnp.float32, -limit, limit)


def _linear_default(key, fan_out, fan_in):
    # PyTorch nn.Linear default init: U(-1/sqrt(fan_in), 1/sqrt(fan_in))
    kw, kb = jax.random.split(key)
    bound = 1.0 / (fan_in ** 0.5)
    w = jax.random.uniform(kw, (fan_out, fan_in), jnp.float32, -bound, bound)
    b = jax.random.uniform(kb, (fan_out, 1), jnp.float32, -bound, bound)
    return w, b


def make_params(key, input_size, hidden_sizes, output_size):
    """Weights stored (out, in) like nn.Linear; last layer xavier + zero bias."""
    h1, h2 = hidden_sizes
    k1, k2, k3 = jax.random.split(key, 3)
    w1, b1 = _linear_default(k1, h1, input_size)
    w2, b2 = _linear_default(k2, h2, h1)
    wl = _xavier_uniform(k3, output_size, h2)         # init_layer_xavier on last_layer
    bl = jnp.zeros((output_size, 1), jnp.float32)
    return (w1, b1, w2, b2, wl, bl)


if __name__ == "__main__":
    key = jax.random.PRNGKey(0)
    kx, kp, ks = jax.random.split(key, 3)

    batch, input_size, output_size = 2, 16, 4
    hidden_sizes = [32, 32]

    x = jax.random.normal(kx, (batch, input_size), jnp.float32)
    params = make_params(kp, input_size, hidden_sizes, output_size)

    action, log_prob = categorical_dist_params_forward(x, params, ks)
    jax.block_until_ready((action, log_prob))

    assert action.shape == (batch,) and action.dtype == jnp.int32
    assert log_prob.shape == (1,) and log_prob.dtype == jnp.float32
    assert bool(jnp.all((action >= 0) & (action < output_size)))
    assert bool(jnp.all(jnp.isfinite(log_prob)))
    assert bool(jnp.all(log_prob <= 0.0))

    print("KERNEL_OK")
</pallas_src>

<mosaic_0001>
module attributes {stable_mosaic.version = 11 : i64} {
  func.func @_categorical_kernel(%arg0: i32, %arg1: memref<16x128xbf16, #tpu.memory_space<vmem>>, %arg2: memref<1x128xf32, #tpu.memory_space<vmem>>, %arg3: memref<32x16xbf16, #tpu.memory_space<vmem>>, %arg4: memref<32x1xf32, #tpu.memory_space<vmem>>, %arg5: memref<32x32xbf16, #tpu.memory_space<vmem>>, %arg6: memref<32x1xf32, #tpu.memory_space<vmem>>, %arg7: memref<4x32xbf16, #tpu.memory_space<vmem>>, %arg8: memref<4x1xf32, #tpu.memory_space<vmem>>, %arg9: memref<1x128xi32, #tpu.memory_space<vmem>>, %arg10: memref<1x128xf32, #tpu.memory_space<vmem>>) attributes {dimension_semantics = [#tpu.dimension_semantics<arbitrary>], iteration_bounds = array<i64: 1>, scalar_prefetch = 0 : i64, scratch_operands = 0 : i64, tpu.core_type = #tpu.core_type<tc>, window_params = [{transform_indices = @transform_0, window_bounds = array<i64: 16, 128>}, {transform_indices = @transform_1, window_bounds = array<i64: 1, 128>}, {pipeline_mode = #tpu.pipeline_mode<synchronous>, transform_indices = @transform_2, window_bounds = array<i64: 32, 16>}, {pipeline_mode = #tpu.pipeline_mode<synchronous>, transform_indices = @transform_3, window_bounds = array<i64: 32, 1>}, {pipeline_mode = #tpu.pipeline_mode<synchronous>, transform_indices = @transform_4, window_bounds = array<i64: 32, 32>}, {pipeline_mode = #tpu.pipeline_mode<synchronous>, transform_indices = @transform_5, window_bounds = array<i64: 32, 1>}, {pipeline_mode = #tpu.pipeline_mode<synchronous>, transform_indices = @transform_6, window_bounds = array<i64: 4, 32>}, {pipeline_mode = #tpu.pipeline_mode<synchronous>, transform_indices = @transform_7, window_bounds = array<i64: 4, 1>}, {transform_indices = @transform_8, window_bounds = array<i64: 1, 128>}, {transform_indices = @transform_9, window_bounds = array<i64: 1, 128>}]} {
    %c0 = arith.constant 0 : index
    %c0_0 = arith.constant 0 : index
    %0 = vector.load %arg1[%c0, %c0_0] : memref<16x128xbf16, #tpu.memory_space<vmem>>, vector<16x128xbf16>
    %c0_1 = arith.constant 0 : index
    %c0_2 = arith.constant 0 : index
    %1 = vector.load %arg3[%c0_1, %c0_2] : memref<32x16xbf16, #tpu.memory_space<vmem>>, vector<32x16xbf16>
    %cst = arith.constant dense<0.000000e+00> : vector<32x128xf32>
    %2 = tpu.matmul %1, %0, %cst {dimension_numbers = #tpu.dot_dimension_numbers<[1], [0], [0], [1], [0, 0, 1, 1], [], []>} : vector<32x16xbf16>, vector<16x128xbf16>, vector<32x128xf32> -> vector<32x128xf32>
    %c0_3 = arith.constant 0 : index
    %c0_4 = arith.constant 0 : index
    %3 = vector.load %arg4[%c0_3, %c0_4] : memref<32x1xf32, #tpu.memory_space<vmem>>, vector<32x1xf32>
    %4 = vector.broadcast %3 : vector<32x1xf32> to vector<32x128xf32>
    %5 = arith.addf %2, %4 : vector<32x128xf32>
    %cst_5 = arith.constant 0.000000e+00 : f32
    %6 = vector.broadcast %cst_5 : f32 to vector<32x128xf32>
    %7 = arith.maximumf %5, %6 : vector<32x128xf32>
    %c0_6 = arith.constant 0 : index
    %c0_7 = arith.constant 0 : index
    %8 = vector.load %arg5[%c0_6, %c0_7] : memref<32x32xbf16, #tpu.memory_space<vmem>>, vector<32x32xbf16>
    %9 = arith.truncf %7 : vector<32x128xf32> to vector<32x128xbf16>
    %cst_8 = arith.constant dense<0.000000e+00> : vector<32x128xf32>
    %10 = tpu.matmul %8, %9, %cst_8 {dimension_numbers = #tpu.dot_dimension_numbers<[1], [0], [0], [1], [0, 0, 1, 1], [], []>} : vector<32x32xbf16>, vector<32x128xbf16>, vector<32x128xf32> -> vector<32x128xf32>
    %c0_9 = arith.constant 0 : index
    %c0_10 = arith.constant 0 : index
    %11 = vector.load %arg6[%c0_9, %c0_10] : memref<32x1xf32, #tpu.memory_space<vmem>>, vector<32x1xf32>
    %12 = vector.broadcast %11 : vector<32x1xf32> to vector<32x128xf32>
    %13 = arith.addf %10, %12 : vector<32x128xf32>
    %cst_11 = arith.constant 0.000000e+00 : f32
    %14 = vector.broadcast %cst_11 : f32 to vector<32x128xf32>
    %15 = arith.maximumf %13, %14 : vector<32x128xf32>
    %c0_12 = arith.constant 0 : index
    %c0_13 = arith.constant 0 : index
    %16 = vector.load %arg7[%c0_12, %c0_13] : memref<4x32xbf16, #tpu.memory_space<vmem>>, vector<4x32xbf16>
    %17 = arith.truncf %15 : vector<32x128xf32> to vector<32x128xbf16>
    %cst_14 = arith.constant dense<0.000000e+00> : vector<4x128xf32>
    %18 = tpu.matmul %16, %17, %cst_14 {dimension_numbers = #tpu.dot_dimension_numbers<[1], [0], [0], [1], [0, 0, 1, 1], [], []>} : vector<4x32xbf16>, vector<32x128xbf16>, vector<4x128xf32> -> vector<4x128xf32>
    %c0_15 = arith.constant 0 : index
    %c0_16 = arith.constant 0 : index
    %19 = vector.load %arg8[%c0_15, %c0_16] : memref<4x1xf32, #tpu.memory_space<vmem>>, vector<4x1xf32>
    %20 = vector.broadcast %19 : vector<4x1xf32> to vector<4x128xf32>
    %21 = arith.addf %18, %20 : vector<4x128xf32>
    %cst_17 = arith.constant dense<0xFF800000> : vector<128xf32>
    %22 = vector.multi_reduction <maximumf>, %21, %cst_17 [0] : vector<4x128xf32> to vector<128xf32>
    %23 = vector.shape_cast %22 : vector<128xf32> to vector<1x128xf32>
    %24 = vector.broadcast %23 : vector<1x128xf32> to vector<4x128xf32>
    %25 = arith.subf %21, %24 : vector<4x128xf32>
    %26 = math.exp %25 : vector<4x128xf32>
    %cst_18 = arith.constant dense<0.000000e+00> : vector<128xf32>
    %27 = vector.multi_reduction <add>, %26, %cst_18 [0] : vector<4x128xf32> to vector<128xf32>
    %28 = vector.shape_cast %27 : vector<128xf32> to vector<1x128xf32>
    %c0_19 = arith.constant 0 : index
    %c0_20 = arith.constant 0 : index
    %29 = vector.load %arg2[%c0_19, %c0_20] : memref<1x128xf32, #tpu.memory_space<vmem>>, vector<1x128xf32>
    %30 = arith.mulf %29, %28 : vector<1x128xf32>
    %cst_21 = arith.constant 0.000000e+00 : f32
    %31 = vector.broadcast %cst_21 : f32 to vector<1x128xf32>
    %c0_i32 = arith.constant 0 : i32
    %32 = vector.broadcast %c0_i32 : i32 to vector<1x128xi32>
    %33 = vector.extract_strided_slice %26 {offsets = [0, 0], sizes = [1, 128], strides = [1, 1]} : vector<4x128xf32> to vector<1x128xf32>
    %34 = arith.addf %31, %33 : vector<1x128xf32>
    %35 = arith.cmpf ole, %34, %30 : vector<1x128xf32>
    %36 = arith.extui %35 : vector<1x128xi1> to vector<1x128xi32>
    %37 = arith.addi %32, %36 : vector<1x128xi32>
    %38 = vector.extract_strided_slice %26 {offsets = [1, 0], sizes = [1, 128], strides = [1, 1]} : vector<4x128xf32> to vector<1x128xf32>
    %39 = arith.addf %34, %38 : vector<1x128xf32>
    %40 = arith.cmpf ole, %39, %30 : vector<1x128xf32>
    %41 = arith.extui %40 : vector<1x128xi1> to vector<1x128xi32>
    %42 = arith.addi %37, %41 : vector<1x128xi32>
    %43 = vector.extract_strided_slice %26 {offsets = [2, 0], sizes = [1, 128], strides = [1, 1]} : vector<4x128xf32> to vector<1x128xf32>
    %44 = arith.addf %39, %43 : vector<1x128xf32>
    %45 = arith.cmpf ole, %44, %30 : vector<1x128xf32>
    %46 = arith.extui %45 : vector<1x128xi1> to vector<1x128xi32>
    %47 = arith.addi %42, %46 : vector<1x128xi32>
    %48 = vector.extract_strided_slice %26 {offsets = [3, 0], sizes = [1, 128], strides = [1, 1]} : vector<4x128xf32> to vector<1x128xf32>
    %49 = arith.addf %44, %48 : vector<1x128xf32>
    %50 = arith.cmpf ole, %49, %30 : vector<1x128xf32>
    %51 = arith.extui %50 : vector<1x128xi1> to vector<1x128xi32>
    %52 = arith.addi %47, %51 : vector<1x128xi32>
    %c3_i32 = arith.constant 3 : i32
    %53 = vector.broadcast %c3_i32 : i32 to vector<1x128xi32>
    %54 = arith.minsi %52, %53 : vector<1x128xi32>
    %55 = tpu.iota {dimensions = array<i32: 0>} : vector<4x128xi32>
    %56 = vector.broadcast %54 : vector<1x128xi32> to vector<4x128xi32>
    %57 = arith.cmpi eq, %55, %56 : vector<4x128xi32>
    %58 = arith.extui %57 : vector<4x128xi1> to vector<4x128xi32>
    %59 = arith.sitofp %58 : vector<4x128xi32> to vector<4x128xf32>
    %60 = arith.mulf %25, %59 : vector<4x128xf32>
    %cst_22 = arith.constant dense<0.000000e+00> : vector<128xf32>
    %61 = vector.multi_reduction <add>, %60, %cst_22 [0] : vector<4x128xf32> to vector<128xf32>
    %62 = vector.shape_cast %61 : vector<128xf32> to vector<1x128xf32>
    %63 = math.log %28 : vector<1x128xf32>
    %64 = arith.subf %62, %63 : vector<1x128xf32>
    %c0_23 = arith.constant 0 : index
    %c0_24 = arith.constant 0 : index
    %65 = vector.load %arg9[%c0_23, %c0_24] : memref<1x128xi32, #tpu.memory_space<vmem>>, vector<1x128xi32>
    tpu.vector_store %arg9[%c0_23, %c0_24], %54 {strides = array<i32>} : memref<1x128xi32, #tpu.memory_space<vmem>>, vector<1x128xi32>,
    %c0_25 = arith.constant 0 : index
    %c0_26 = arith.constant 0 : index
    %66 = vector.load %arg10[%c0_25, %c0_26] : memref<1x128xf32, #tpu.memory_space<vmem>>, vector<1x128xf32>
    tpu.vector_store %arg10[%c0_25, %c0_26], %64 {strides = array<i32>} : memref<1x128xf32, #tpu.memory_space<vmem>>, vector<1x128xf32>,
    return
  }
  func.func @transform_0(%arg0: i32) -> (i32, i32) {
    %c0_i32 = arith.constant 0 : i32
    %c0_i32_0 = arith.constant 0 : i32
    return %c0_i32, %arg0 : i32, i32
  }
  func.func @transform_1(%arg0: i32) -> (i32, i32) {
    %c0_i32 = arith.constant 0 : i32
    %c0_i32_0 = arith.constant 0 : i32
    return %c0_i32, %arg0 : i32, i32
  }
  func.func @transform_2(%arg0: i32) -> (i32, i32) {
    %c0_i32 = arith.constant 0 : i32
    %c0_i32_0 = arith.constant 0 : i32
    %c0_i32_1 = arith.constant 0 : i32
    return %c0_i32, %c0_i32_0 : i32, i32
  }
  func.func @transform_3(%arg0: i32) -> (i32, i32) {
    %c0_i32 = arith.constant 0 : i32
    %c0_i32_0 = arith.constant 0 : i32
    %c0_i32_1 = arith.constant 0 : i32
    return %c0_i32, %c0_i32_0 : i32, i32
  }
  func.func @transform_4(%arg0: i32) -> (i32, i32) {
    %c0_i32 = arith.constant 0 : i32
    %c0_i32_0 = arith.constant 0 : i32
    %c0_i32_1 = arith.constant 0 : i32
    return %c0_i32, %c0_i32_0 : i32, i32
  }
  func.func @transform_5(%arg0: i32) -> (i32, i32) {
    %c0_i32 = arith.constant 0 : i32
    %c0_i32_0 = arith.constant 0 : i32
    %c0_i32_1 = arith.constant 0 : i32
    return %c0_i32, %c0_i32_0 : i32, i32
  }
  func.func @transform_6(%arg0: i32) -> (i32, i32) {
    %c0_i32 = arith.constant 0 : i32
    %c0_i32_0 = arith.constant 0 : i32
    %c0_i32_1 = arith.constant 0 : i32
    return %c0_i32, %c0_i32_0 : i32, i32
  }
  func.func @transform_7(%arg0: i32) -> (i32, i32) {
    %c0_i32 = arith.constant 0 : i32
    %c0_i32_0 = arith.constant 0 : i32
    %c0_i32_1 = arith.constant 0 : i32
    return %c0_i32, %c0_i32_0 : i32, i32
  }
  func.func @transform_8(%arg0: i32) -> (i32, i32) {
    %c0_i32 = arith.constant 0 : i32
    %c0_i32_0 = arith.constant 0 : i32
    return %c0_i32, %arg0 : i32, i32
  }
  func.func @transform_9(%arg0: i32) -> (i32, i32) {
    %c0_i32 = arith.constant 0 : i32
    %c0_i32_0 = arith.constant 0 : i32
    return %c0_i32, %arg0 : i32, i32
  }
}

</mosaic_0001>

<llo_original>
// kernel: tpu_custom_call.1
$region0: #{tpu_custom_call.1}
  #allocation0 [shape = 'u32[]', space=smem, size = 0x4, offset = 0x4, fixed_abs, tag = 'smem constant byte address 0x4 - core index']
  #allocation1 [shape = 'u32[72,128]{1,0:T(1,128)}', space=vmem, size = 0x9000, scoped, tag = 'internal scratch']
  %s0 = inlined_call_operand.vmem [shape: bf16[16,128], index: 0, kind: input, shape index: {}]
  %s1 = inlined_call_operand.vmem [shape: f32[1,128], index: 1, kind: input, shape index: {}]
  %s2 = inlined_call_operand.vmem [shape: bf16[32,16], index: 2, kind: input, shape index: {}]
  %s3 = inlined_call_operand.vmem [shape: f32[32,1], index: 3, kind: input, shape index: {}]
  %s4 = inlined_call_operand.vmem [shape: bf16[32,32], index: 4, kind: input, shape index: {}]
  %s5 = inlined_call_operand.vmem [shape: f32[32,1], index: 5, kind: input, shape index: {}]
  %s6 = inlined_call_operand.vmem [shape: bf16[4,32], index: 6, kind: input, shape index: {}]
  %s7 = inlined_call_operand.vmem [shape: f32[4,1], index: 7, kind: input, shape index: {}]
  %s8 = inlined_call_operand.hbm [shape: s32[1,128], index: 8, kind: output, shape index: {0}]
  %s9 = inlined_call_operand.hbm [shape: f32[1,128], index: 9, kind: output, shape index: {1}]
  %10 = xla_tuple %s8, %s9
  %s11 = sld [smem:[#allocation0]]
  $region50: #{tpu_custom_call.1} parent=0
    _
  %s13 = ssub.s32 1, %s11
  %s14 = scalar_select 0, %s13, %s11
  $region1: #{tpu_custom_call.1} parent=0
    #allocation2 [shape = 'u8[512]{0}', space=vmem, size = 0x400, scoped, tag = 'output window, operand 0, single buffered']
    #allocation3 [shape = 's32[1]{0}', space=sflag, size = 0x4, scoped, tag = 'scoped memory for tpu_custom_call.1']
    #allocation4 [shape = 'u8[512]{0}', space=vmem, size = 0x400, scoped, tag = 'output window, operand 1, single buffered']
    #allocation5 [shape = 's32[1]{0}', space=sflag, size = 0x4, scoped, tag = 'scoped memory for tpu_custom_call.1']
    %15 = vsyncpa [#allocation3], 0
    %16 = vsyncpa [#allocation5], 0
    // Predicated region
    $region2: #{tpu_custom_call.1} parent=1 // pred_check
      _
    $region3: #{tpu_custom_call.1} parent=1 // pred_check_branch
      %18 = sbr.rel (0) target = $region5
    $region4: #{tpu_custom_call.1} parent=1 // pred_region
      _
    $region5: #{tpu_custom_call.1} parent=1 // pred_fallthru
      _
    // Predicated region
    $region6: #{tpu_custom_call.1} parent=1 // pred_check
      _
    $region7: #{tpu_custom_call.1} parent=1 // pred_check_branch
      %20 = sbr.rel (0) target = $region9
    $region8: #{tpu_custom_call.1} parent=1 // pred_region
      _
    $region9: #{tpu_custom_call.1} parent=1 // pred_fallthru
      _
    // Predicated region
    $region10: #{tpu_custom_call.1} parent=1 // pred_check
      _
    $region11: #{tpu_custom_call.1} parent=1 // pred_check_branch
      %22 = sbr.rel (0) target = $region13
    $region12: #{tpu_custom_call.1} parent=1 // pred_region
      _
    $region13: #{tpu_custom_call.1} parent=1 // pred_fallthru
      _
    // Predicated region
    $region14: #{tpu_custom_call.1} parent=1 // pred_check
      _
    $region15: #{tpu_custom_call.1} parent=1 // pred_check_branch
      %24 = sbr.rel (0) target = $region17
    $region16: #{tpu_custom_call.1} parent=1 // pred_region
      _
    $region17: #{tpu_custom_call.1} parent=1 // pred_fallthru
      _
    // Predicated region
    $region18: #{tpu_custom_call.1} parent=1 // pred_check
      _
    $region19: #{tpu_custom_call.1} parent=1 // pred_check_branch
      %26 = sbr.rel (0) target = $region21
    $region20: #{tpu_custom_call.1} parent=1 // pred_region
      _
    $region21: #{tpu_custom_call.1} parent=1 // pred_fallthru
      _
    // Predicated region
    $region22: #{tpu_custom_call.1} parent=1 // pred_check
      _
    $region23: #{tpu_custom_call.1} parent=1 // pred_check_branch
      %28 = sbr.rel (0) target = $region25
    $region24: #{tpu_custom_call.1} parent=1 // pred_region
      _
    $region25: #{tpu_custom_call.1} parent=1 // pred_fallthru
      _
    // Predicated region
    $region26: #{tpu_custom_call.1} parent=1 // pred_check
      _
    $region27: #{tpu_custom_call.1} parent=1 // pred_check_branch
      %30 = sbr.rel (0) target = $region29
    $region28: #{tpu_custom_call.1} parent=1 // pred_region
      _
    $region29: #{tpu_custom_call.1} parent=1 // pred_fallthru
      _
    // Predicated region
    $region30: #{tpu_custom_call.1} parent=1 // pred_check
      _
    $region31: #{tpu_custom_call.1} parent=1 // pred_check_branch
      %32 = sbr.rel (0) target = $region33
    $region32: #{tpu_custom_call.1} parent=1 // pred_region
      _
    $region33: #{tpu_custom_call.1} parent=1 // pred_fallthru
      _
    %v34 = vld [vmem:[%s0] sm:$0xf]
    %v35 = vld [vmem:[%s0 + $0x4] sm:$0xf]
    %v36 = vld [vmem:[%s2] sm:$0xf]
    %v37 = vld [vmem:[%s2 + $0x4] sm:$0xf]
    %v38 = vld [vmem:[%s2 + $0x8] sm:$0xf]
    %v39 = vld [vmem:[%s2 + $0xc] sm:$0xf]
    %v40 = vld [vmem:[%s3] sm:$0xff]
    %v41 = vld [vmem:[%s3 + $0x8] sm:$0xff]
    %v42 = vld [vmem:[%s3 + $0x10] sm:$0xff]
    %v43 = vld [vmem:[%s3 + $0x18] sm:$0xff]
    %45 = vset.pattern.permute.xlu0 0
    %46 = vperm.xlu0 %45, %v40
    %v47 = vpop.permute.xlu0 %46
    %50 = vset.pattern.permute.xlu0 0
    %51 = vperm.xlu0 %50, %v41
    %v52 = vpop.permute.xlu0 %51
    %55 = vset.pattern.permute.xlu0 0
    %56 = vperm.xlu0 %55, %v42
    %v57 = vpop.permute.xlu0 %56
    %60 = vset.pattern.permute.xlu0 0
    %61 = vperm.xlu0 %60, %v43
    %v62 = vpop.permute.xlu0 %61
    %v68 = vunpack.c.l.b16 %v36
    %v69 = vunpack.c.l.b16 %v37
    %v70 = vunpack.c.l.b16 %v38
    %v71 = vunpack.c.l.b16 %v39
    %v72 = vpack.c.b16 %v69, %v68
    %v73 = vpack.c.b16 %v71, %v70
    %v76 = vunpack.c.l.b16 %v34
    %v77 = vunpack.c.l.b16 %v35
    %v78 = vpack.c.b16 %v77, %v76
    %vm80 = vcmask 130048
    %v82 = vsel %vm80, %v72, 0
    %v85 = vsel %vm80, %v73, 0
    %87 = vmatpush.bf16.msra.mxu0 0
    %88 = vmatpush.bf16.msra.mxu0 0
    %89 = vmatpush.bf16.msra.mxu0 0
    %90 = vmatpush.bf16.msra.mxu0 0
    %91 = vmatpush.bf16.msra.mxu0 0
    %92 = vmatpush.bf16.msra.mxu0 0
    %93 = vmatpush.bf16.msra.mxu0 0
    %94 = vmatpush.bf16.msra.mxu0 %v78
    %95 = vmatmul.bf16.gmra.mxu0 %v82
    %v96 = vpop.f32.mrf.mxu0
    %v97 = vadd.f32 %v47, %v96
    %v98 = vpop.f32.mrf.mxu0
    %v99 = vadd.f32 %v52, %v98
    %100 = vmatmul.bf16.gmra.mxu0 %v85
    %v101 = vpop.f32.mrf.mxu0
    %v102 = vadd.f32 %v57, %v101
    %v103 = vpop.f32.mrf.mxu0
    %v104 = vadd.f32 %v62, %v103
    %105 = vdwg.mxu0
    %v106 = vmax.f32 %v97, 0.0
    %v107 = vmax.f32 %v99, 0.0
    %v108 = vmax.f32 %v102, 0.0
    %v109 = vmax.f32 %v104, 0.0
    %v110 = vld [vmem:[%s4] sm:$0xf]
    %v111 = vld [vmem:[%s4 + $0x4] sm:$0xf]
    %v112 = vld [vmem:[%s4 + $0x8] sm:$0xf]
    %v113 = vld [vmem:[%s4 + $0xc] sm:$0xf]
    %v114 = vpack.c.bf16 %v107, %v106
    %v115 = vpack.c.bf16 %v109, %v108
    %v116 = vld [vmem:[%s5] sm:$0xff]
    %v117 = vld [vmem:[%s5 + $0x8] sm:$0xff]
    %v118 = vld [vmem:[%s5 + $0x10] sm:$0xff]
    %v119 = vld [vmem:[%s5 + $0x18] sm:$0xff]
    %121 = vset.pattern.permute.xlu0 0
    %122 = vperm.xlu0 %121, %v116
    %v123 = vpop.permute.xlu0 %122
    %126 = vset.pattern.permute.xlu0 0
    %127 = vperm.xlu0 %126, %v117
    %v128 = vpop.permute.xlu0 %127
    %131 = vset.pattern.permute.xlu0 0
    %132 = vperm.xlu0 %131, %v118
    %v133 = vpop.permute.xlu0 %132
    %136 = vset.pattern.permute.xlu0 0
    %137 = vperm.xlu0 %136, %v119
    %v138 = vpop.permute.xlu0 %137
    %v144 = vunpack.c.l.b16 %v110
    %v145 = vunpack.c.l.b16 %v111
    %v146 = vunpack.c.l.b16 %v112
    %v147 = vunpack.c.l.b16 %v113
    %v148 = vpack.c.b16 %v145, %v144
    %v149 = vpack.c.b16 %v147, %v146
    %vm150 = vcmask 261120
    %v152 = vsel %vm150, %v148, 0
    %v155 = vsel %vm150, %v149, 0
    %157 = vmatpush.bf16.msra.mxu0 0
    %158 = vmatpush.bf16.msra.mxu0 0
    %159 = vmatpush.bf16.msra.mxu0 0
    %160 = vmatpush.bf16.msra.mxu0 0
    %161 = vmatpush.bf16.msra.mxu0 0
    %162 = vmatpush.bf16.msra.mxu0 0
    %163 = vmatpush.bf16.msra.mxu0 %v115
    %164 = vmatpush.bf16.msra.mxu0 %v114
    %165 = vmatmul.bf16.gmra.mxu0 %v152
    %v166 = vpop.f32.mrf.mxu0
    %v167 = vadd.f32 %v123, %v166
    %v168 = vpop.f32.mrf.mxu0
    %v169 = vadd.f32 %v128, %v168
    %170 = vmatmul.bf16.gmra.mxu0 %v155
    %v171 = vpop.f32.mrf.mxu0
    %v172 = vadd.f32 %v133, %v171
    %v173 = vpop.f32.mrf.mxu0
    %v174 = vadd.f32 %v138, %v173
    %175 = vdwg.mxu0
    %v176 = vmax.f32 %v167, 0.0
    %v177 = vmax.f32 %v169, 0.0
    %v178 = vmax.f32 %v172, 0.0
    %v179 = vmax.f32 %v174, 0.0
    %v180 = vld [vmem:[%s6] sm:$0x3]
    %v181 = vpack.c.bf16 %v177, %v176
    %v182 = vpack.c.bf16 %v179, %v178
    %v183 = vld [vmem:[%s7] sm:$0xf]
    %185 = vset.pattern.permute.xlu0 0
    %186 = vperm.xlu0 %185, %v183
    %v187 = vpop.permute.xlu0 %186
    %v190 = vsel %vm150, %v180, 0
    %192 = vmatpush.bf16.msra.mxu0 0
    %193 = vmatpush.bf16.msra.mxu0 0
    %194 = vmatpush.bf16.msra.mxu0 0
    %195 = vmatpush.bf16.msra.mxu0 0
    %196 = vmatpush.bf16.msra.mxu0 0
    %197 = vmatpush.bf16.msra.mxu0 0
    %198 = vmatpush.bf16.msra.mxu0 %v182
    %199 = vmatpush.bf16.msra.mxu0 %v181
    %200 = vmatmul.bf16.gmra.mxu0 %v190
    %v201 = vpop.f32.mrf.mxu0
    %v202 = vadd.f32 %v187, %v201
    %v203 = vpop.f32.mrf.mxu0
    %204 = vdwg.mxu0
    %vm205 = vcmask 1043456
    %v206 = vsel %vm205, %v202, -inf
    %v207 = vrot.slane %v206, 4
    %v208 = vmax.f32 %v206, %v207
    %v209 = vrot.slane %v208, 2
    %v210 = vmax.f32 %v208, %v209
    %v211 = vrot.slane %v210, 1
    %v212 = vmax.f32 %v210, %v211
    %v213 = vsub.f32 %v202, %v212
    %v214 = vmul.f32 %v213, 1.442695
    %v215 = vpow.pop %v214
    %v216 = vsel %vm205, %v215, 0.0
    %v217 = vrot.slane %v216, 4
    %v218 = vadd.f32 %v216, %v217
    %v219 = vrot.slane %v218, 2
    %v220 = vadd.f32 %v218, %v219
    %v221 = vrot.slane %v220, 1
    %v222 = vadd.f32 %v220, %v221
    %v223 = vld [vmem:[%s1] sm:$0x1]
    %v224 = vmul.f32 %v223, %v222
    %v225 = vadd.f32 %v215, 0.0
    %vm226 = vcmp.le.f32.partialorder %v225, %v224
    %v227 = vsel %vm226, 1, 0
    %v229 = vrot.slane %v215, 1
    %v231 = vadd.f32 %v225, %v229
    %vm232 = vcmp.le.f32.partialorder %v231, %v224
    %v233 = vsel %vm232, 1, 0
    %v234 = vadd.s32 %v227, %v233
    %v235 = vrot.slane %v215, 2
    %v237 = vadd.f32 %v231, %v235
    %vm238 = vcmp.le.f32.partialorder %v237, %v224
    %v239 = vsel %vm238, 1, 0
    %v240 = vadd.s32 %v234, %v239
    %v241 = vrot.slane %v215, 3
    %v243 = vadd.f32 %v237, %v241
    %vm244 = vcmp.le.f32.partialorder %v243, %v224
    %v245 = vsel %vm244, 1, 0
    %v246 = vadd.s32 %v240, %v245
    %vm247 = vcmp.lt.s32.totalorder %v246, 3
    %v248 = vsel %vm247, %v246, 3
    %v249 = vlaneseq
    %v250 = vshrl.u32 %v249, 7
    %v251 = vperm.slane %v248, 0
    %vm252 = vcmp.eq.s32.totalorder %v250, %v251
    %v253 = vsel %vm252, 1, 0
    %v254 = vcvt.s32.f32 %v253
    %v255 = vmul.f32 %v213, %v254
    %v256 = vsel %vm205, %v255, 0.0
    %v257 = vrot.slane %v256, 4
    %v258 = vadd.f32 %v256, %v257
    %v259 = vrot.slane %v258, 2
    %v260 = vadd.f32 %v258, %v259
    %v261 = vrot.slane %v260, 1
    %v262 = vadd.f32 %v260, %v261
    %v263 = vlog2.pop %v222
    %v264 = vmul.f32 %v263, 0.6931472
    %v265 = vsub.f32 %v262, %v264
    %266 = vst [vmem:[#allocation2] sm:$0x1] %v248
    %267 = vst [vmem:[#allocation4] sm:$0x1] %v265
    // Predicated region
    $region34: #{tpu_custom_call.1} parent=1 // pred_check
      _
    $region35: #{tpu_custom_call.1} parent=1 // pred_check_branch
      %269 = sbr.rel (0) target = $region37
    $region36: #{tpu_custom_call.1} parent=1 // pred_region
      %271 = vsyncadd [#allocation3], 0
      %s273 = sshll.u32 [#allocation2], 4
      %s274 = int_to_ptr.vmem [resolvable:$true] %s273
      %s275 = sshll.u32 %s8, 4
      %s276 = int_to_ptr.hbm [resolvable:$true] %s275
      %278 = dma.vmem_to_hbm [thread:$0]  %s274, 16, %s276, [#allocation3]
    $region37: #{tpu_custom_call.1} parent=1 // pred_fallthru
      _
    // Predicated region
    $region38: #{tpu_custom_call.1} parent=1 // pred_check
      _
    $region39: #{tpu_custom_call.1} parent=1 // pred_check_branch
      %280 = sbr.rel (0) target = $region41
    $region40: #{tpu_custom_call.1} parent=1 // pred_region
      %282 = vsyncadd [#allocation5], 0
      %s284 = sshll.u32 [#allocation4], 4
      %s285 = int_to_ptr.vmem [resolvable:$true] %s284
      %s286 = sshll.u32 %s9, 4
      %s287 = int_to_ptr.hbm [resolvable:$true] %s286
      %289 = dma.vmem_to_hbm [thread:$0]  %s285, 16, %s287, [#allocation5]
    $region41: #{tpu_custom_call.1} parent=1 // pred_fallthru
      _
    // Predicated region
    $region42: #{tpu_custom_call.1} parent=1 // pred_check
      _
    $region43: #{tpu_custom_call.1} parent=1 // pred_check_branch
      %291 = sbr.rel (0) target = $region45
    $region44: #{tpu_custom_call.1} parent=1 // pred_region
      %293 = dma.done [#allocation3], 16
    $region45: #{tpu_custom_call.1} parent=1 // pred_fallthru
      _
    // Predicated region
    $region46: #{tpu_custom_call.1} parent=1 // pred_check
      _
    $region47: #{tpu_custom_call.1} parent=1 // pred_check_branch
      %295 = sbr.rel (0) target = $region49
    $region48: #{tpu_custom_call.1} parent=1 // pred_region
      %297 = dma.done [#allocation5], 16
    $region49: #{tpu_custom_call.1} parent=1 // pred_fallthru
      _
    %298 = vsyncpa [#allocation3], 1
    %299 = vsyncpa [#allocation5], 1

</llo_original>
